<compile_context>
chip_gen: v7x
topology: tpu7x:2x2x1
jax: 0.10.0
libtpu: 0.0.40
codegen_flags: <defaults>
</compile_context>

<pallas_src>
import functools

import jax
import jax.numpy as jnp
from jax.experimental import pallas as pl
from jax.experimental.pallas import tpu as pltpu


def _conv_relu_kernel(x_ref, w_ref, b_ref, o_ref, xrow_ref, *, W, K, Cg, relu):
    """Fused odd-K conv + bias + optional ReLU for a block of B images.

    x_ref:    (B*Cg, HW)        B images, rows = (image, padded channel), lanes = pixel
    w_ref:    (Cout, K*K*Cg)    weights, column = (kh*K + kw)*Cg + c
    b_ref:    (Cout, 1)         bias (f32, exact)
    o_ref:    (B, Cout, HW)     output block
    xrow_ref: (B*Cg, HW + 2*M)  halo scratch; every row is one (image, channel)
                                plane with an M-wide zero margin on each side
    """
    B = o_ref.shape[0]
    HW = x_ref.shape[1]
    P = K // 2
    M = P * (W + 1)                      # margin covers the largest tap offset
    sdt = xrow_ref.dtype                 # == input dtype (f32 here)

    # Zero ONLY the margins (cheap, every step: correct even when the grid axis
    # is megacore-partitioned, since scratch is per-core); the interior is
    # fully overwritten right below -> no stale VMEM is ever read.
    if P > 0:
        xrow_ref[:, pl.ds(0, M)] = jnp.zeros((x_ref.shape[0], M), sdt)
        xrow_ref[:, pl.ds(M + HW, M)] = jnp.zeros((x_ref.shape[0], M), sdt)
    xrow_ref[:, pl.ds(M, HW)] = x_ref[...].astype(sdt)

    # Horizontal edge masks, hoisted: one per nonzero dc, reused across kh and
    # across images.  Kept in f32 (mask-multiply before the single bf16 cast:
    # v5e has no native bf16 VPU).  Vertical edges come from the zero margins.
    col = jax.lax.broadcasted_iota(jnp.int32, (1, HW), 1) % W
    hmask = {0: None}
    for dc in range(1, P + 1):
        hmask[dc] = (col < W - dc).astype(sdt)       # reading column c + dc
        hmask[-dc] = (col >= dc).astype(sdt)         # reading column c - dc

    # Build the (K*K*Cg, B*HW) im2col operand entirely in vregs (no scratch
    # round trip).  Rows are tap-major (matching w_ref's column order), lanes
    # are image-major; each tap slice is one 8-sublane-aligned (Cg, HW) block,
    # so both concatenations sit on (8,128) tile boundaries.
    tap_rows = []
    for kh in range(K):
        for kw in range(K):
            d = (kh - P) * W + (kw - P)
            mk = hmask[kw - P]
            per_img = []
            for b in range(B):
                v = xrow_ref[pl.ds(b * Cg, Cg), pl.ds(M + d, HW)]  # shifted window
                if mk is not None:
                    v = v * mk                        # kill horizontal wrap-around
                per_img.append(v)
            tap_rows.append(per_img[0] if B == 1
                            else jnp.concatenate(per_img, axis=1))  # (Cg, B*HW)
    im2col = (tap_rows[0] if len(tap_rows) == 1
              else jnp.concatenate(tap_rows, axis=0))               # (K*K*Cg, B*HW)

    # ONE MXU contraction for the whole image block; bf16 operands (single
    # cast), f32 accumulation.  Output is lane-dense: (Cout, B*HW).
    acc = jnp.dot(w_ref[...], im2col.astype(w_ref.dtype),
                  preferred_element_type=jnp.float32)
    acc = acc + b_ref[...]                            # exact f32 bias
    if relu:
        acc = jnp.maximum(acc, 0.0)
    for b in range(B):
        o_ref[b] = acc[:, b * HW:(b + 1) * HW].astype(o_ref.dtype)


def conv_relu(x_nchw, w_oihw, b, *, relu=True, operand_dtype=jnp.bfloat16,
              images_per_step=None):
    """ConvReLU forward: Conv2d(KxK, stride 1, SAME) + bias (+ ReLU).

    x_nchw: (N, Cin, H, W); w_oihw: (Cout, Cin, K, K); b: (Cout,)
    Returns (N, Cout, H, W), same dtype as x.

    images_per_step: images packed into each grid step's single matmul.
      Default ceil(N/2): two grid steps (one per v7x TensorCore); on
      single-TC v5e/v6e pass N for one fat step.
    """
    N, Cin, H, W = x_nchw.shape
    Cout, Cin_w, K, K2 = w_oihw.shape
    assert Cin_w == Cin and K == K2 and K % 2 == 1, "odd square kernels only"
    HW = H * W
    P = K // 2
    M = P * (W + 1)

    # Channel pad to a multiple of 8 sublanes (zero data x zero weights).
    Cg = ((Cin + 7) // 8) * 8
    x_flat = x_nchw.reshape(N, Cin, HW)               # contiguous => free reshape
    if Cg != Cin:
        x_flat = jnp.pad(x_flat, ((0, 0), (0, Cg - Cin), (0, 0)))

    # Batch-of-images per grid step (pad N up if it doesn't divide evenly).
    if images_per_step is None:
        images_per_step = (N + 1) // 2
    B = int(max(1, min(images_per_step, N)))
    num_steps = -(-N // B)
    N_pad = num_steps * B
    if N_pad != N:
        x_flat = jnp.pad(x_flat, ((0, N_pad - N), (0, 0), (0, 0)))
    x2d = x_flat.reshape(N_pad * Cg, HW)              # rows = (image, channel)

    # Weights: (Cout, K*K*Cg), column = (kh*K + kw)*Cg + c; pad channels = 0.
    w_pad = w_oihw
    if Cg != Cin:
        w_pad = jnp.pad(w_oihw, ((0, 0), (0, Cg - Cin), (0, 0), (0, 0)))
    w_mat = jnp.transpose(w_pad, (0, 2, 3, 1)).reshape(Cout, K * K * Cg)
    w_mat = w_mat.astype(operand_dtype)
    b_col = b.reshape(Cout, 1).astype(jnp.float32)

    kern = functools.partial(_conv_relu_kernel, W=W, K=K, Cg=Cg, relu=relu)
    out_flat = pl.pallas_call(
        kern,
        out_shape=jax.ShapeDtypeStruct((N_pad, Cout, HW), x_nchw.dtype),
        grid_spec=pltpu.PrefetchScalarGridSpec(
            num_scalar_prefetch=0,
            grid=(num_steps,),
            in_specs=[
                pl.BlockSpec((B * Cg, HW), lambda n: (n, 0)),
                pl.BlockSpec((Cout, K * K * Cg), lambda n: (0, 0)),
                pl.BlockSpec((Cout, 1), lambda n: (0, 0)),
            ],
            out_specs=pl.BlockSpec((B, Cout, HW), lambda n: (n, 0, 0)),
            scratch_shapes=[
                pltpu.VMEM((B * Cg, HW + 2 * M), x_nchw.dtype),
            ],
        ),
        compiler_params=pltpu.CompilerParams(
            dimension_semantics=("parallel",)),
    )(x2d, w_mat, b_col)
    out = out_flat[:N] if N_pad != N else out_flat
    return out.reshape(N, Cout, H, W)


# ----------------------- pure-JAX reference (for checking) ------------------
def _ref_conv_relu(x_nchw, w_oihw, b, relu=True):
    y = jax.lax.conv_general_dilated(
        x_nchw, w_oihw, window_strides=(1, 1), padding="SAME",
        dimension_numbers=("NCHW", "OIHW", "NCHW"))
    y = y + b[None, :, None, None]
    return jnp.maximum(y, 0.0) if relu else y


if __name__ == "__main__":
    key = jax.random.PRNGKey(0)
    k_x, k_w, k_b, k_x2 = jax.random.split(key, 4)

    # ConvReLU(in_ch=4, out_ch=32, kernel_sz=3) on a (2, 4, 16, 16) input.
    N, Cin, H, W = 2, 4, 16, 16
    Cout, K = 32, 3

    x = jax.random.normal(k_x, (N, Cin, H, W), jnp.float32)
    w = 0.1 * jax.random.normal(k_w, (Cout, Cin, K, K), jnp.float32)
    b = 0.05 * jax.random.normal(k_b, (Cout,), jnp.float32)
    y_ref = _ref_conv_relu(x, w, b, relu=True)

    # Primary path: bf16 MXU operands, f32 accumulation, fused ReLU,
    # default two grid steps (v7x-friendly).
    y = conv_relu(x, w, b, relu=True)
    jax.block_until_ready(y)
    assert y.shape == (N, Cout, H, W)
    assert jnp.allclose(y, y_ref, atol=2e-2, rtol=2e-2), \
        float(jnp.max(jnp.abs(y - y_ref)))

    # Batched-lane path: the whole batch in ONE grid step / one matmul
    # (recommended on single-TC v5e/v6e).
    y_b = conv_relu(x, w, b, relu=True, images_per_step=N)
    assert jnp.allclose(y_b, y_ref, atol=2e-2, rtol=2e-2), \
        float(jnp.max(jnp.abs(y_b - y_ref)))

    # relu=False branch of the module.
    y_nr = conv_relu(x, w, b, relu=False)
    y_nr_ref = _ref_conv_relu(x, w, b, relu=False)
    assert jnp.allclose(y_nr, y_nr_ref, atol=2e-2, rtol=2e-2)

    # f32-operand path (test-only): tight numerical check of halo/mask/batching.
    y32 = conv_relu(x, w, b, relu=True, operand_dtype=jnp.float32,
                    images_per_step=N)
    assert jnp.allclose(y32, y_ref, atol=1e-3, rtol=1e-3), \
        float(jnp.max(jnp.abs(y32 - y_ref)))

    # Ragged batch (N not a multiple of images_per_step) exercises the pad path.
    x3 = jax.random.normal(k_x2, (3, Cin, H, W), jnp.float32)
    y3 = conv_relu(x3, w, b, relu=True, operand_dtype=jnp.float32,
                   images_per_step=2)
    y3_ref = _ref_conv_relu(x3, w, b, relu=True)
    assert y3.shape == (3, Cout, H, W)
    assert jnp.allclose(y3, y3_ref, atol=1e-3, rtol=1e-3), \
        float(jnp.max(jnp.abs(y3 - y3_ref)))

    print("KERNEL_OK")
</pallas_src>

<mosaic_0001>
module attributes {stable_mosaic.version = 11 : i64} {
  func.func @_conv_relu_kernel(%arg0: i32, %arg1: memref<8x256xf32, #tpu.memory_space<vmem>>, %arg2: memref<32x72xbf16, #tpu.memory_space<vmem>>, %arg3: memref<32x1xf32, #tpu.memory_space<vmem>>, %arg4: memref<1x32x256xf32, #tpu.memory_space<vmem>>, %arg5: memref<8x290xf32, #tpu.memory_space<vmem>>) attributes {dimension_semantics = [#tpu.dimension_semantics<parallel>], iteration_bounds = array<i64: 2>, scalar_prefetch = 0 : i64, scratch_operands = 1 : i64, tpu.core_type = #tpu.core_type<tc>, window_params = [{transform_indices = @transform_0, window_bounds = array<i64: 8, 256>}, {pipeline_mode = #tpu.pipeline_mode<synchronous>, transform_indices = @transform_1, window_bounds = array<i64: 32, 72>}, {pipeline_mode = #tpu.pipeline_mode<synchronous>, transform_indices = @transform_2, window_bounds = array<i64: 32, 1>}, {transform_indices = @transform_3, window_bounds = array<i64: 1, 32, 256>}]} {
    %cst = arith.constant 0.000000e+00 : f32
    %0 = vector.broadcast %cst : f32 to vector<8x17xf32>
    %c0 = arith.constant 0 : index
    %c0_0 = arith.constant 0 : index
    %1 = vector.load %arg5[%c0, %c0_0] : memref<8x290xf32, #tpu.memory_space<vmem>>, vector<8x17xf32>
    tpu.vector_store %arg5[%c0, %c0_0], %0 {strides = array<i32>} : memref<8x290xf32, #tpu.memory_space<vmem>>, vector<8x17xf32>,
    %cst_1 = arith.constant 0.000000e+00 : f32
    %2 = vector.broadcast %cst_1 : f32 to vector<8x17xf32>
    %c0_2 = arith.constant 0 : index
    %c273 = arith.constant 273 : index
    %3 = vector.load %arg5[%c0_2, %c273] : memref<8x290xf32, #tpu.memory_space<vmem>>, vector<8x17xf32>
    tpu.vector_store %arg5[%c0_2, %c273], %2 {strides = array<i32>} : memref<8x290xf32, #tpu.memory_space<vmem>>, vector<8x17xf32>,
    %c0_3 = arith.constant 0 : index
    %c0_4 = arith.constant 0 : index
    %4 = vector.load %arg1[%c0_3, %c0_4] : memref<8x256xf32, #tpu.memory_space<vmem>>, vector<8x256xf32>
    %c0_5 = arith.constant 0 : index
    %c17 = arith.constant 17 : index
    %5 = vector.load %arg5[%c0_5, %c17] : memref<8x290xf32, #tpu.memory_space<vmem>>, vector<8x256xf32>
    tpu.vector_store %arg5[%c0_5, %c17], %4 {strides = array<i32>} : memref<8x290xf32, #tpu.memory_space<vmem>>, vector<8x256xf32>,
    %6 = tpu.iota {dimensions = array<i32: 1>} : vector<1x256xi32>
    %c16_i32 = arith.constant 16 : i32
    %c0_i32 = arith.constant 0 : i32
    %7 = arith.cmpi eq, %c16_i32, %c0_i32 : i32
    %c1_i32 = arith.constant 1 : i32
    %8 = arith.select %7, %c1_i32, %c16_i32 : i32
    %9 = vector.broadcast %8 : i32 to vector<1x256xi32>
    %10 = arith.remsi %6, %9 : vector<1x256xi32>
    %c0_i32_6 = arith.constant 0 : i32
    %11 = vector.broadcast %c0_i32_6 : i32 to vector<1x256xi32>
    %12 = arith.cmpi ne, %10, %11 : vector<1x256xi32>
    %c0_i32_7 = arith.constant 0 : i32
    %13 = vector.broadcast %c0_i32_7 : i32 to vector<1x256xi32>
    %14 = arith.cmpi slt, %10, %13 : vector<1x256xi32>
    %c0_i32_8 = arith.constant 0 : i32
    %15 = arith.cmpi slt, %8, %c0_i32_8 : i32
    %16 = vector.broadcast %15 : i1 to vector<1x256xi1>
    %17 = vector.broadcast %16 : vector<1x256xi1> to vector<1x256xi1>
    %18 = arith.xori %14, %17 : vector<1x256xi1>
    %19 = arith.andi %18, %12 : vector<1x256xi1>
    %20 = vector.broadcast %8 : i32 to vector<1x256xi32>
    %21 = arith.addi %10, %20 : vector<1x256xi32>
    %22 = arith.select %19, %21, %10 : vector<1x256xi1>, vector<1x256xi32>
    %c15_i32 = arith.constant 15 : i32
    %23 = vector.broadcast %c15_i32 : i32 to vector<1x256xi32>
    %24 = arith.cmpi slt, %22, %23 : vector<1x256xi32>
    %25 = arith.extui %24 : vector<1x256xi1> to vector<1x256xi32>
    %26 = arith.sitofp %25 : vector<1x256xi32> to vector<1x256xf32>
    %c1_i32_9 = arith.constant 1 : i32
    %27 = vector.broadcast %c1_i32_9 : i32 to vector<1x256xi32>
    %28 = arith.cmpi sge, %22, %27 : vector<1x256xi32>
    %29 = arith.extui %28 : vector<1x256xi1> to vector<1x256xi32>
    %30 = arith.sitofp %29 : vector<1x256xi32> to vector<1x256xf32>
    %c0_10 = arith.constant 0 : index
    %c0_11 = arith.constant 0 : index
    %31 = vector.load %arg5[%c0_10, %c0_11] : memref<8x290xf32, #tpu.memory_space<vmem>>, vector<8x256xf32>
    %32 = vector.broadcast %30 : vector<1x256xf32> to vector<8x256xf32>
    %33 = arith.mulf %31, %32 : vector<8x256xf32>
    %c0_12 = arith.constant 0 : index
    %c1 = arith.constant 1 : index
    %34 = vector.load %arg5[%c0_12, %c1] : memref<8x290xf32, #tpu.memory_space<vmem>>, vector<8x256xf32>
    %c0_13 = arith.constant 0 : index
    %c2 = arith.constant 2 : index
    %35 = vector.load %arg5[%c0_13, %c2] : memref<8x290xf32, #tpu.memory_space<vmem>>, vector<8x256xf32>
    %36 = vector.broadcast %26 : vector<1x256xf32> to vector<8x256xf32>
    %37 = arith.mulf %35, %36 : vector<8x256xf32>
    %c0_14 = arith.constant 0 : index
    %c16 = arith.constant 16 : index
    %38 = vector.load %arg5[%c0_14, %c16] : memref<8x290xf32, #tpu.memory_space<vmem>>, vector<8x256xf32>
    %39 = vector.broadcast %30 : vector<1x256xf32> to vector<8x256xf32>
    %40 = arith.mulf %38, %39 : vector<8x256xf32>
    %c0_15 = arith.constant 0 : index
    %c17_16 = arith.constant 17 : index
    %41 = vector.load %arg5[%c0_15, %c17_16] : memref<8x290xf32, #tpu.memory_space<vmem>>, vector<8x256xf32>
    %c0_17 = arith.constant 0 : index
    %c18 = arith.constant 18 : index
    %42 = vector.load %arg5[%c0_17, %c18] : memref<8x290xf32, #tpu.memory_space<vmem>>, vector<8x256xf32>
    %43 = vector.broadcast %26 : vector<1x256xf32> to vector<8x256xf32>
    %44 = arith.mulf %42, %43 : vector<8x256xf32>
    %c0_18 = arith.constant 0 : index
    %c32 = arith.constant 32 : index
    %45 = vector.load %arg5[%c0_18, %c32] : memref<8x290xf32, #tpu.memory_space<vmem>>, vector<8x256xf32>
    %46 = vector.broadcast %30 : vector<1x256xf32> to vector<8x256xf32>
    %47 = arith.mulf %45, %46 : vector<8x256xf32>
    %c0_19 = arith.constant 0 : index
    %c33 = arith.constant 33 : index
    %48 = vector.load %arg5[%c0_19, %c33] : memref<8x290xf32, #tpu.memory_space<vmem>>, vector<8x256xf32>
    %c0_20 = arith.constant 0 : index
    %c34 = arith.constant 34 : index
    %49 = vector.load %arg5[%c0_20, %c34] : memref<8x290xf32, #tpu.memory_space<vmem>>, vector<8x256xf32>
    %50 = vector.broadcast %26 : vector<1x256xf32> to vector<8x256xf32>
    %51 = arith.mulf %49, %50 : vector<8x256xf32>
    %52 = tpu.concatenate %33, %34, %37, %40, %41, %44, %47, %48, %51 in 0 : vector<8x256xf32>, vector<8x256xf32>, vector<8x256xf32>, vector<8x256xf32>, vector<8x256xf32>, vector<8x256xf32>, vector<8x256xf32>, vector<8x256xf32>, vector<8x256xf32> -> vector<72x256xf32>
    %c0_21 = arith.constant 0 : index
    %c0_22 = arith.constant 0 : index
    %53 = vector.load %arg2[%c0_21, %c0_22] : memref<32x72xbf16, #tpu.memory_space<vmem>>, vector<32x72xbf16>
    %54 = arith.truncf %52 : vector<72x256xf32> to vector<72x256xbf16>
    %cst_23 = arith.constant dense<0.000000e+00> : vector<32x256xf32>
    %55 = tpu.matmul %53, %54, %cst_23 {dimension_numbers = #tpu.dot_dimension_numbers<[1], [0], [0], [1], [0, 0, 1, 1], [], []>} : vector<32x72xbf16>, vector<72x256xbf16>, vector<32x256xf32> -> vector<32x256xf32>
    %c0_24 = arith.constant 0 : index
    %c0_25 = arith.constant 0 : index
    %56 = vector.load %arg3[%c0_24, %c0_25] : memref<32x1xf32, #tpu.memory_space<vmem>>, vector<32x1xf32>
    %57 = vector.broadcast %56 : vector<32x1xf32> to vector<32x256xf32>
    %58 = arith.addf %55, %57 : vector<32x256xf32>
    %cst_26 = arith.constant 0.000000e+00 : f32
    %59 = vector.broadcast %cst_26 : f32 to vector<32x256xf32>
    %60 = arith.maximumf %58, %59 : vector<32x256xf32>
    %c0_27 = arith.constant 0 : index
    %c0_28 = arith.constant 0 : index
    %c0_29 = arith.constant 0 : index
    %61 = vector.load %arg4[%c0_27, %c0_28, %c0_29] : memref<1x32x256xf32, #tpu.memory_space<vmem>>, vector<1x32x256xf32>
    %62 = vector.shape_cast %61 : vector<1x32x256xf32> to vector<32x256xf32>
    %63 = vector.shape_cast %60 : vector<32x256xf32> to vector<1x32x256xf32>
    tpu.vector_store %arg4[%c0_27, %c0_28, %c0_29], %63 {strides = array<i32>} : memref<1x32x256xf32, #tpu.memory_space<vmem>>, vector<1x32x256xf32>,
    return
  }
  func.func @transform_0(%arg0: i32) -> (i32, i32) {
    %c0_i32 = arith.constant 0 : i32
    %c0_i32_0 = arith.constant 0 : i32
    return %arg0, %c0_i32 : i32, i32
  }
  func.func @transform_1(%arg0: i32) -> (i32, i32) {
    %c0_i32 = arith.constant 0 : i32
    %c0_i32_0 = arith.constant 0 : i32
    %c0_i32_1 = arith.constant 0 : i32
    return %c0_i32, %c0_i32_0 : i32, i32
  }
  func.func @transform_2(%arg0: i32) -> (i32, i32) {
    %c0_i32 = arith.constant 0 : i32
    %c0_i32_0 = arith.constant 0 : i32
    %c0_i32_1 = arith.constant 0 : i32
    return %c0_i32, %c0_i32_0 : i32, i32
  }
  func.func @transform_3(%arg0: i32) -> (i32, i32, i32) {
    %c0_i32 = arith.constant 0 : i32
    %c0_i32_0 = arith.constant 0 : i32
    %c0_i32_1 = arith.constant 0 : i32
    return %arg0, %c0_i32, %c0_i32_0 : i32, i32, i32
  }
}

</mosaic_0001>

<llo_original>
// kernel: tpu_custom_call.1
$region0: #{tpu_custom_call.1}
  #allocation0 [shape = 'u32[]', space=smem, size = 0x4, offset = 0x4, fixed_abs, tag = 'smem constant byte address 0x4 - core index']
  #allocation1 [shape = 'u32[144,128]{1,0:T(1,128)}', space=vmem, size = 0x12000, scoped, tag = 'internal scratch']
  #allocation2 [shape = 'f32[8,290]{1,0:T(8,128)}', space=vmem, size = 0x3000, scoped, tag = 'scratch operand']
  %s0 = inlined_call_operand.vmem [shape: f32[16,256], index: 0, kind: input, shape index: {}]
  %s1 = inlined_call_operand.hbm [shape: bf16[32,72], index: 1, kind: input, shape index: {}]
  %s2 = inlined_call_operand.vmem [shape: f32[32,1], index: 2, kind: input, shape index: {}]
  %s3 = inlined_call_operand.hbm [shape: f32[2,32,256], index: 3, kind: output, shape index: {}]
  %s4 = sld [smem:[#allocation0]]
  $region49: #{tpu_custom_call.1} parent=0
    _
  %s6 = ssub.s32 1, %s4
  %s7 = scalar_select 0, %s6, %s4
  $region1: #{tpu_custom_call.1} parent=0
    #allocation3 [shape = 'u8[8192]{0}', space=vmem, size = 0x2000, scoped, tag = 'input window, operand 1, single buffered']
    #allocation4 [shape = 's32[2]{0}', space=sflag, size = 0x8, scoped, tag = 'scoped memory for tpu_custom_call.1']
    #allocation5 [shape = 's32[2]{0}', space=sflag, size = 0x8, scoped, tag = 'scoped memory for tpu_custom_call.1']
    #allocation6 [shape = 'u8[65536]{0}', space=vmem, size = 0x10000, scoped, tag = 'output window, operand 0']
    %8 = vsyncpa [#allocation4], 0
    %9 = vsyncpa [#allocation5], 0
    %s10 = scalar_lea.sflag [#allocation5], 1
    %11 = vsyncpa %s10, 0
    loop: start=0, step=1, limit=4
    $region2: #{tpu_custom_call.1} parent=1 // loop_pre_header
      _
    $region3: #{tpu_custom_call.1} parent=1 // loop_header
      %s13 = sphi 0, %s17
      %p14 = scmp.ge.s32.totalorder %s13, 4
      %s23 = sphi 0, %s25
      %s26 = sphi 0, %s23
      %s27 = sphi 0, %s26
      %s43 = sphi 0, %s27
      %s47 = sphi 0, %s47
      %s49 = sphi 0, %s47
      %s50 = sphi 0, %s49
      %s64 = sphi 0, %s50
      %s68 = sphi 0, %s68
      %s70 = sphi 0, %s68
      %s71 = sphi 0, %s70
      %s85 = sphi 0, %s71
      %s91 = sphi 0, %s93
      %s94 = sphi 0, %s91
      %s95 = sphi 0, %s94
      %s111 = sphi 0, %s95
    $region4: #{tpu_custom_call.1} parent=1 // loop_header_branch
      %16 = sbr.rel (%p14) target = $region8
    $region5: #{tpu_custom_call.1} parent=1 // loop_body
      %s18 = ssub.s32 %s13, 1
      %s19 = ssub.s32 %s13, 2
      %s20 = sadd.s32 %s13, 1
      %s21 = ssub.s32 %s13, %s20
      %p22 = scmp.eq.s32.totalorder %s21, 0
      %s24 = sadd.s32 %s23, 1
      %s25 = scalar_select %p22, %s23, %s24
      %p28 = pneg %p22
      %p29 = scmp.eq.s32.totalorder %s13, 1
      %p30 = por %p28, %p29
      %p31 = scmp.ne.s32.totalorder %s23, %s26
      %p32 = scmp.eq.s32.totalorder %s13, 0
      %p33 = por %p31, %p32
      %p34 = scmp.ne.s32.totalorder %s23, %s26
      %p35 = scmp.eq.s32.totalorder %s18, 1
      %p36 = por %p34, %p35
      %p37 = scmp.ne.s32.totalorder %s26, %s27
      %p38 = scmp.eq.s32.totalorder %s18, 0
      %p39 = por %p37, %p38
      %p40 = scmp.ne.s32.totalorder %s26, %s27
      %p41 = scmp.eq.s32.totalorder %s19, 1
      %p42 = por %p40, %p41
      %p44 = scmp.ne.s32.totalorder %s27, %s43
      %p45 = scmp.eq.s32.totalorder %s19, 0
      %p46 = por %p44, %p45
      %s48 = sadd.s32 %s47, 1
      %p51 = scmp.eq.s32.totalorder %s13, 1
      %p52 = scmp.ne.s32.totalorder %s47, %s49
      %p53 = scmp.eq.s32.totalorder %s13, 0
      %p54 = por %p52, %p53
      %p55 = scmp.ne.s32.totalorder %s47, %s49
      %p56 = scmp.eq.s32.totalorder %s18, 1
      %p57 = por %p55, %p56
      %p58 = scmp.ne.s32.totalorder %s49, %s50
      %p59 = scmp.eq.s32.totalorder %s18, 0
      %p60 = por %p58, %p59
      %p61 = scmp.ne.s32.totalorder %s49, %s50
      %p62 = scmp.eq.s32.totalorder %s19, 1
      %p63 = por %p61, %p62
      %p65 = scmp.ne.s32.totalorder %s50, %s64
      %p66 = scmp.eq.s32.totalorder %s19, 0
      %p67 = por %p65, %p66
      %s69 = sadd.s32 %s68, 1
      %p72 = scmp.eq.s32.totalorder %s13, 1
      %p73 = scmp.ne.s32.totalorder %s68, %s70
      %p74 = scmp.eq.s32.totalorder %s13, 0
      %p75 = por %p73, %p74
      %p76 = scmp.ne.s32.totalorder %s68, %s70
      %p77 = scmp.eq.s32.totalorder %s18, 1
      %p78 = por %p76, %p77
      %p79 = scmp.ne.s32.totalorder %s70, %s71
      %p80 = scmp.eq.s32.totalorder %s18, 0
      %p81 = por %p79, %p80
      %p82 = scmp.ne.s32.totalorder %s70, %s71
      %p83 = scmp.eq.s32.totalorder %s19, 1
      %p84 = por %p82, %p83
      %p86 = scmp.ne.s32.totalorder %s71, %s85
      %p87 = scmp.eq.s32.totalorder %s19, 0
      %p88 = por %p86, %p87
      %s89 = ssub.s32 %s13, %s20
      %p90 = scmp.eq.s32.totalorder %s89, 0
      %s92 = sadd.s32 %s91, 1
      %s93 = scalar_select %p90, %s91, %s92
      %p96 = pneg %p90
      %p97 = scmp.eq.s32.totalorder %s13, 1
      %p98 = por %p96, %p97
      %p99 = scmp.ne.s32.totalorder %s91, %s94
      %p100 = scmp.eq.s32.totalorder %s13, 0
      %p101 = por %p99, %p100
      %p102 = scmp.ne.s32.totalorder %s91, %s94
      %p103 = scmp.eq.s32.totalorder %s18, 1
      %p104 = por %p102, %p103
      %p105 = scmp.ne.s32.totalorder %s94, %s95
      %p106 = scmp.eq.s32.totalorder %s18, 0
      %p107 = por %p105, %p106
      %p108 = scmp.ne.s32.totalorder %s94, %s95
      %p109 = scmp.eq.s32.totalorder %s19, 1
      %p110 = por %p108, %p109
      %p112 = scmp.ne.s32.totalorder %s95, %s111
      %p113 = scmp.eq.s32.totalorder %s19, 0
      %p114 = por %p112, %p113
      %p115 = scmp.le.s32.totalorder 1, %s13
      %p116 = scmp.lt.s32.totalorder %s13, 3
      %p117 = pnand %p115, %p116
      %p118 = pneg %p117
      // Predicated region
      $region9: #{tpu_custom_call.1} parent=5 // pred_check
        _
      $region10: #{tpu_custom_call.1} parent=5 // pred_check_branch
        %120 = sbr.rel (%p117) target = $region12
      $region11: #{tpu_custom_call.1} parent=5 // pred_region
        %s121 = ssub.s32 %s13, 1
        // Predicated region
        $region13: #{tpu_custom_call.1} parent=11 // pred_check
          %p122 = pneg %p60
        $region14: #{tpu_custom_call.1} parent=11 // pred_check_branch
          %124 = sbr.rel (%p122) target = $region16
        $region15: #{tpu_custom_call.1} parent=11 // pred_region
          %s126 = ssub.s32 256, 256
          %127 = vsyncadd [#allocation4], %s126
          %s128 = sshll.u32 [#allocation3], 4
          %s129 = int_to_ptr.vmem [resolvable:$true] %s128
          %134 = dma.hbm_to_vmem [thread:$0]  %s1, 256, %s129, [#allocation4], 64, 64, 4
        $region16: #{tpu_custom_call.1} parent=11 // pred_fallthru
          _
        // Predicated region
        $region17: #{tpu_custom_call.1} parent=11 // pred_check
          %p135 = pneg %p81
        $region18: #{tpu_custom_call.1} parent=11 // pred_check_branch
          %137 = sbr.rel (%p135) target = $region20
        $region19: #{tpu_custom_call.1} parent=11 // pred_region
          _
        $region20: #{tpu_custom_call.1} parent=11 // pred_fallthru
          _
      $region12: #{tpu_custom_call.1} parent=5 // pred_fallthru
        _
      %p138 = scmp.lt.s32.totalorder %s13, 2
      // Predicated region
      $region21: #{tpu_custom_call.1} parent=5 // pred_check
        %p139 = pneg %p138
      $region22: #{tpu_custom_call.1} parent=5 // pred_check_branch
        %141 = sbr.rel (%p139) target = $region24
      $region23: #{tpu_custom_call.1} parent=5 // pred_region
        // Predicated region
        $region25: #{tpu_custom_call.1} parent=23 // pred_check
          %p142 = pneg %p33
        $region26: #{tpu_custom_call.1} parent=23 // pred_check_branch
          %144 = sbr.rel (%p142) target = $region28
        $region27: #{tpu_custom_call.1} parent=23 // pred_region
          %p145 = scmp.lt.s32.totalorder %s13, 1
          %s146 = scalar_select %p145, %s13, 1
          %s147 = smul.addr %s146, 2
          %s148 = smul.addr %s147, 8
          %s149 = scalar_lea.vmem %s0, %s148
        $region28: #{tpu_custom_call.1} parent=23 // pred_fallthru
          _
      $region24: #{tpu_custom_call.1} parent=5 // pred_fallthru
        _
      %p150 = scmp.le.s32.totalorder 1, %s13
      %p151 = scmp.lt.s32.totalorder %s13, 3
      %p152 = pnand %p150, %p151
      %p153 = pneg %p152
      // Predicated region
      $region29: #{tpu_custom_call.1} parent=5 // pred_check
        _
      $region30: #{tpu_custom_call.1} parent=5 // pred_check_branch
        %155 = sbr.rel (%p152) target = $region32
      $region31: #{tpu_custom_call.1} parent=5 // pred_region
        %s156 = ssub.s32 %s13, 1
        // Predicated region
        $region33: #{tpu_custom_call.1} parent=31 // pred_check
          %p157 = pneg %p60
        $region34: #{tpu_custom_call.1} parent=31 // pred_check_branch
          %159 = sbr.rel (%p157) target = $region36
        $region35: #{tpu_custom_call.1} parent=31 // pred_region
          %160 = dma.done [#allocation4], 256
        $region36: #{tpu_custom_call.1} parent=31 // pred_fallthru
          _
        %p161 = scmp.lt.s32.totalorder %s18, 1
        %s162 = scalar_select %p161, %s18, 1
        %s163 = smul.addr %s162, 2
        %s164 = smul.addr %s163, 8
        %s165 = scalar_lea.vmem %s0, %s164
        %p166 = pneg %p39
        %p167 = pneg %p36
        %p168 = pneg %p60
        %p169 = pneg %p57
        %p170 = pneg %p81
        %p171 = pneg %p78
        %p172 = pneg %p107
        %p173 = pneg %p104
        %s174 = sand.u32 %s94, 1
        %s175 = scalar_lea.sflag [#allocation5], %s174
        %s176 = sand.u32 %s94, 1
        %s177 = smul.addr %s176, 64
        %s178 = scalar_lea.vmem [#allocation6], %s177
        %p179 = scmp.lt.s32.totalorder %s18, 1
        %s180 = scalar_select %p179, %s18, 1
        %s181 = smul.addr %s180, 2
        %s182 = smul.addr %s181, 8
        %s183 = scalar_lea.vmem %s0, %s182
        %vm185 = vcmask 138240
        %186 = vst.msk [vmem:[#allocation2] sm:$0xff] %vm185, 0.0
        %vm187 = vcmask 277640
        %188 = vst.msk [vmem:[#allocation2 + $0x10] sm:$0xff] %vm187, 0.0
        %v189 = vld [vmem:[%s183] sm:$0xff]
        %v190 = vld [vmem:[%s183 + $0x8] sm:$0xff]
        %193 = vrot.lane.b32.xlu0 %v189, 17
        %v194 = vpop.permute.xlu0 %193
        %195 = vrot.lane.b32.xlu0 %v190, 17
        %v196 = vpop.permute.xlu0 %195
        %v197 = vsel %vm185, %v194, %v196
        %vm201 = vcmask 1047688
        %202 = vst.msk [vmem:[#allocation2] sm:$0xff] %vm201, %v194
        %203 = vst [vmem:[#allocation2 + $0x8] sm:$0xff] %v197
        %204 = vst.msk [vmem:[#allocation2 + $0x10] sm:$0xff] %vm185, %v196
        %v205 = vlaneseq
        %v206 = vand.u32 %v205, 127
        %v207 = vadd.s32 %v206, 128
        %vm208 = vcmp.lt.s32.totalorder %v206, 0
        %v209 = vsub.s32 0, %v206
        %v210 = vsel %vm208, %v209, %v206
        %v211 = vshrl.u32 %v210, 4
        %v212 = vand.u32 %v210, 15
        %v213 = vsub.s32 0, %v212
        %v214 = vsel %vm208, %v213, %v212
        %vm215 = vcmp.lt.s32.totalorder %v207, 0
        %v216 = vsub.s32 0, %v207
        %v217 = vsel %vm215, %v216, %v207
        %v218 = vshrl.u32 %v217, 4
        %v219 = vand.u32 %v217, 15
        %v220 = vsub.s32 0, %v219
        %v221 = vsel %vm215, %v220, %v219
        %vm222 = vcmp.ne.s32.totalorder %v214, 0
        %vm223 = vcmp.ne.s32.totalorder %v221, 0
        %vm224 = vcmp.lt.s32.totalorder %v214, 0
        %vm225 = vcmp.lt.s32.totalorder %v221, 0
        %vm226 = vmand %vm224, %vm222
        %vm227 = vmand %vm225, %vm223
        %v228 = vadd.s32 %v214, 16
        %v229 = vadd.s32 %v221, 16
        %v230 = vsel %vm226, %v228, %v214
        %v231 = vsel %vm227, %v229, %v221
        %vm232 = vcmp.lt.s32.totalorder %v230, 15
        %vm233 = vcmp.lt.s32.totalorder %v231, 15
        %v234 = vsel %vm232, 1, 0
        %v235 = vsel %vm233, 1, 0
        %v236 = vcvt.s32.f32 %v234
        %v237 = vcvt.s32.f32 %v235
        %vm238 = vcmp.ge.s32.totalorder %v230, 1
        %vm239 = vcmp.ge.s32.totalorder %v231, 1
        %v240 = vsel %vm238, 1, 0
        %v241 = vsel %vm239, 1, 0
        %v242 = vcvt.s32.f32 %v240
        %v243 = vcvt.s32.f32 %v241
        %v244 = vld [vmem:[#allocation2] sm:$0xff]
        %v245 = vld [vmem:[#allocation2 + $0x8] sm:$0xff]
        %v246 = vmul.f32 %v244, %v242
        %v247 = vmul.f32 %v245, %v243
        %v248 = vld [vmem:[#allocation2 + $0x10] sm:$0xff]
        %251 = vrot.lane.b32.xlu0 %v236, 2
        %v252 = vpop.permute.xlu0 %251
        %253 = vrot.lane.b32.xlu0 %v237, 2
        %v254 = vpop.permute.xlu0 %253
        %vm255 = vcmask 15360
        %v256 = vsel %vm255, %v252, %v254
        %v260 = vmul.f32 %v244, %v252
        %v261 = vmul.f32 %v245, %v256
        %v262 = vmul.f32 %v248, %v254
        %265 = vrot.lane.b32.xlu0 %v242, 16
        %v266 = vpop.permute.xlu0 %265
        %267 = vrot.lane.b32.xlu0 %v243, 16
        %v268 = vpop.permute.xlu0 %267
        %vm269 = vcmask 130048
        %v270 = vsel %vm269, %v266, %v268
        %v274 = vmul.f32 %v244, %v266
        %v275 = vmul.f32 %v245, %v270
        %v276 = vmul.f32 %v248, %v268
        %277 = vrot.lane.b32.xlu0 %v236, 18
        %v278 = vpop.permute.xlu0 %277
        %279 = vrot.lane.b32.xlu0 %v237, 18
        %v280 = vpop.permute.xlu0 %279
        %vm281 = vcmask 146432
        %v282 = vsel %vm281, %v278, %v280
        %v286 = vmul.f32 %v244, %v278
        %v287 = vmul.f32 %v245, %v282
        %v288 = vmul.f32 %v248, %v280
        %289 = vrot.lane.b32.xlu0 %v242, 32
        %v290 = vpop.permute.xlu0 %289
        %291 = vrot.lane.b32.xlu0 %v243, 32
        %v292 = vpop.permute.xlu0 %291
        %vm293 = vcmask 261120
        %v294 = vsel %vm293, %v290, %v292
        %v298 = vmul.f32 %v244, %v290
        %v299 = vmul.f32 %v245, %v294
        %v300 = vmul.f32 %v248, %v292
        %301 = vrot.lane.b32.xlu0 %v236, 34
        %v302 = vpop.permute.xlu0 %301
        %303 = vrot.lane.b32.xlu0 %v237, 34
        %v304 = vpop.permute.xlu0 %303
        %vm305 = vcmask 277504
        %v306 = vsel %vm305, %v302, %v304
        %v310 = vmul.f32 %v244, %v302
        %v311 = vmul.f32 %v245, %v306
        %v312 = vmul.f32 %v248, %v304
        %316 = vrot.lane.b32.xlu0 %v244, 127
        %v317 = vpop.permute.xlu0 %316
        %318 = vrot.lane.b32.xlu0 %v245, 127
        %v319 = vpop.permute.xlu0 %318
        %320 = vrot.lane.b32.xlu0 %v248, 127
        %v321 = vpop.permute.xlu0 %320
        %vm322 = vcmask 1039360
        %v323 = vsel %vm322, %v317, %v319
        %v324 = vsel %vm322, %v319, %v321
        %330 = vrot.lane.b32.xlu0 %v260, 126
        %v331 = vpop.permute.xlu0 %330
        %332 = vrot.lane.b32.xlu0 %v261, 126
        %v333 = vpop.permute.xlu0 %332
        %334 = vrot.lane.b32.xlu0 %v262, 126
        %v335 = vpop.permute.xlu0 %334
        %vm336 = vcmask 1031168
        %v337 = vsel %vm336, %v331, %v333
        %v338 = vsel %vm336, %v333, %v335
        %344 = vrot.lane.b32.xlu0 %v274, 112
        %v345 = vpop.permute.xlu0 %344
        %346 = vrot.lane.b32.xlu0 %v275, 112
        %v347 = vpop.permute.xlu0 %346
        %348 = vrot.lane.b32.xlu0 %v276, 112
        %v349 = vpop.permute.xlu0 %348
        %vm350 = vcmask 916480
        %v351 = vsel %vm350, %v345, %v347
        %v352 = vsel %vm350, %v347, %v349
        %355 = vrot.lane.b32.xlu0 %v244, 111
        %v356 = vpop.permute.xlu0 %355
        %357 = vrot.lane.b32.xlu0 %v245, 111
        %v358 = vpop.permute.xlu0 %357
        %359 = vrot.lane.b32.xlu0 %v248, 111
        %v360 = vpop.permute.xlu0 %359
        %vm361 = vcmask 908288
        %v362 = vsel %vm361, %v356, %v358
        %v363 = vsel %vm361, %v358, %v360
        %369 = vrot.lane.b32.xlu0 %v286, 110
        %v370 = vpop.permute.xlu0 %369
        %371 = vrot.lane.b32.xlu0 %v287, 110
        %v372 = vpop.permute.xlu0 %371
        %373 = vrot.lane.b32.xlu0 %v288, 110
        %v374 = vpop.permute.xlu0 %373
        %vm375 = vcmask 900096
        %v376 = vsel %vm375, %v370, %v372
        %v377 = vsel %vm375, %v372, %v374
        %383 = vrot.lane.b32.xlu0 %v298, 96
        %v384 = vpop.permute.xlu0 %383
        %385 = vrot.lane.b32.xlu0 %v299, 96
        %v386 = vpop.permute.xlu0 %385
        %387 = vrot.lane.b32.xlu0 %v300, 96
        %v388 = vpop.permute.xlu0 %387
        %vm389 = vcmask 785408
        %v390 = vsel %vm389, %v384, %v386
        %v391 = vsel %vm389, %v386, %v388
        %394 = vrot.lane.b32.xlu0 %v244, 95
        %v395 = vpop.permute.xlu0 %394
        %396 = vrot.lane.b32.xlu0 %v245, 95
        %v397 = vpop.permute.xlu0 %396
        %398 = vrot.lane.b32.xlu0 %v248, 95
        %v399 = vpop.permute.xlu0 %398
        %vm400 = vcmask 777216
        %v401 = vsel %vm400, %v395, %v397
        %v402 = vsel %vm400, %v397, %v399
        %408 = vrot.lane.b32.xlu0 %v310, 94
        %v409 = vpop.permute.xlu0 %408
        %410 = vrot.lane.b32.xlu0 %v311, 94
        %v411 = vpop.permute.xlu0 %410
        %412 = vrot.lane.b32.xlu0 %v312, 94
        %v413 = vpop.permute.xlu0 %412
        %vm414 = vcmask 769024
        %v415 = vsel %vm414, %v409, %v411
        %v416 = vsel %vm414, %v411, %v413
        %v419 = vld [vmem:[#allocation3] sm:$0xf]
        %v420 = vld [vmem:[#allocation3 + $0x4] sm:$0xf]
        %v421 = vld [vmem:[#allocation3 + $0x8] sm:$0xf]
        %v422 = vld [vmem:[#allocation3 + $0xc] sm:$0xf]
        %v423 = vpack.c.bf16 %v323, %v246
        %v424 = vpack.c.bf16 %v324, %v247
        %v425 = vpack.c.bf16 %v351, %v337
        %v426 = vpack.c.bf16 %v352, %v338
        %v427 = vpack.c.bf16 %v376, %v362
        %v428 = vpack.c.bf16 %v377, %v363
        %v429 = vpack.c.bf16 %v401, %v390
        %v430 = vpack.c.bf16 %v402, %v391
        %v431 = vpack.c.bf16 %v415, %v415
        %v432 = vpack.c.bf16 %v416, %v416
        %v433 = vld [vmem:[%s2] sm:$0xff]
        %v434 = vld [vmem:[%s2 + $0x8] sm:$0xff]
        %v435 = vld [vmem:[%s2 + $0x10] sm:$0xff]
        %v436 = vld [vmem:[%s2 + $0x18] sm:$0xff]
        %438 = vset.pattern.permute.xlu0 0
        %439 = vperm.xlu0 %438, %v433
        %v440 = vpop.permute.xlu0 %439
        %443 = vset.pattern.permute.xlu0 0
        %444 = vperm.xlu0 %443, %v434
        %v445 = vpop.permute.xlu0 %444
        %448 = vset.pattern.permute.xlu0 0
        %449 = vperm.xlu0 %448, %v435
        %v450 = vpop.permute.xlu0 %449
        %453 = vset.pattern.permute.xlu0 0
        %454 = vperm.xlu0 %453, %v436
        %v455 = vpop.permute.xlu0 %454
        %v461 = vunpack.c.l.b16 %v419
        %v462 = vunpack.c.l.b16 %v420
        %v463 = vunpack.c.l.b16 %v421
        %v464 = vunpack.c.l.b16 %v422
        %v465 = vpack.c.b16 %v462, %v461
        %v466 = vpack.c.b16 %v464, %v463
        %vm467 = vcmask 588800
        %v469 = vsel %vm467, %v465, 0
        %v472 = vsel %vm467, %v466, 0
        %vm474 = vcmask 1043456
        %v476 = vsel %vm474, %v431, 0
        %v479 = vsel %vm474, %v432, 0
        %481 = vmatprep.subr.bf16.mxu0 %v424
        %482 = vmatpush1.bf16.msra.mxu0 %v423
        %483 = vmatprep.subr.bf16.mxu0 %v426
        %484 = vmatpush1.bf16.msra.mxu0 %v425
        %485 = vmatprep.subr.bf16.mxu0 %v428
        %486 = vmatpush1.bf16.msra.mxu0 %v427
        %487 = vmatprep.subr.bf16.mxu0 %v430
        %488 = vmatpush1.bf16.msra.mxu0 %v429
        %489 = vmatprep.subr.bf16.mxu0 %v479
        %490 = vmatpush1.bf16.msra.mxu0 %v476
        %491 = vmatprep.subr.bf16.mxu0 0
        %492 = vmatpush1.bf16.msra.mxu0 0
        %493 = vmatprep.subr.bf16.mxu0 0
        %494 = vmatpush1.bf16.msra.mxu0 0
        %495 = vmatprep.subr.bf16.mxu0 0
        %496 = vmatpush1.bf16.msra.mxu0 0
        %497 = vmatprep.subr.bf16.mxu0 0
        %498 = vmatpush1.bf16.msra.mxu0 0
        %499 = vmatprep.subr.bf16.mxu0 0
        %500 = vmatpush1.bf16.msra.mxu0 0
        %501 = vmatprep.subr.bf16.mxu0 0
        %502 = vmatpush1.bf16.msra.mxu0 0
        %503 = vmatprep.subr.bf16.mxu0 0
        %504 = vmatpush1.bf16.msra.mxu0 0
        %505 = vmatprep.subr.bf16.mxu0 0
        %506 = vmatpush1.bf16.msra.mxu0 0
        %507 = vmatprep.subr.bf16.mxu0 0
        %508 = vmatpush1.bf16.msra.mxu0 0
        %509 = vmatprep.subr.bf16.mxu0 0
        %510 = vmatpush1.bf16.msra.mxu0 0
        %511 = vmatprep.subr.bf16.mxu0 0
        %512 = vmatpush1.bf16.msra.mxu0 0
        %513 = vmatprep.mubr.bf16.mxu0 0
        %514 = vmatmul.mubr.bf16.gmra.mrb[0].mxu0 %v469
        %v515 = vpop.f32.mrb[0].mxu0
        %v516 = vadd.f32 %v440, %v515
        %v517 = vpop.f32.mrb[0].mxu0
        %v518 = vadd.f32 %v440, %v517
        %v519 = vpop.f32.mrb[0].mxu0
        %v520 = vadd.f32 %v445, %v519
        %v521 = vpop.f32.mrb[0].mxu0
        %v522 = vadd.f32 %v445, %v521
        %523 = vmatprep.mubr.bf16.mxu0 0
        %524 = vmatmul.mubr.bf16.gmra.mrb[0].mxu0 %v472
        %v525 = vpop.f32.mrb[0].mxu0
        %v526 = vadd.f32 %v450, %v525
        %v527 = vpop.f32.mrb[0].mxu0
        %v528 = vadd.f32 %v450, %v527
        %v529 = vpop.f32.mrb[0].mxu0
        %v530 = vadd.f32 %v455, %v529
        %v531 = vpop.f32.mrb[0].mxu0
        %v532 = vadd.f32 %v455, %v531
        %533 = vdwg.mxu0
        %v534 = vmax.f32 %v516, 0.0
        %v535 = vmax.f32 %v518, 0.0
        %v536 = vmax.f32 %v520, 0.0
        %v537 = vmax.f32 %v522, 0.0
        %v538 = vmax.f32 %v526, 0.0
        %v539 = vmax.f32 %v528, 0.0
        %v540 = vmax.f32 %v530, 0.0
        %v541 = vmax.f32 %v532, 0.0
        %542 = vst [vmem:[%s178] sm:$0xff] %v534
        %543 = vst [vmem:[%s178 + $0x8] sm:$0xff] %v535
        %544 = vst [vmem:[%s178 + $0x10] sm:$0xff] %v536
        %545 = vst [vmem:[%s178 + $0x18] sm:$0xff] %v537
        %546 = vst [vmem:[%s178 + $0x20] sm:$0xff] %v538
        %547 = vst [vmem:[%s178 + $0x28] sm:$0xff] %v539
        %548 = vst [vmem:[%s178 + $0x30] sm:$0xff] %v540
        %549 = vst [vmem:[%s178 + $0x38] sm:$0xff] %v541
        %s550 = sand.u32 %s94, 1
        %s551 = scalar_lea.sflag [#allocation5], %s550
        %s552 = sand.u32 %s94, 1
        %s553 = smul.addr %s552, 64
        %s554 = scalar_lea.vmem [#allocation6], %s553
        // Predicated region
        $region37: #{tpu_custom_call.1} parent=31 // pred_check
          %p555 = pneg %p104
        $region38: #{tpu_custom_call.1} parent=31 // pred_check_branch
          %557 = sbr.rel (%p555) target = $region40
        $region39: #{tpu_custom_call.1} parent=31 // pred_region
          %s559 = ssub.s32 1024, 1024
          %560 = vsyncadd %s551, %s559
          %s561 = smul.addr %s18, 8
          %s562 = smul.addr %s561, 128
          %s563 = scalar_lea.hbm %s3, %s562
          %s564 = sshll.u32 %s554, 4
          %s565 = int_to_ptr.vmem [resolvable:$true] %s564
          %570 = dma.vmem_to_hbm [thread:$0]  %s565, 1024, %s563, %s551, 256, 256, 16
        $region40: #{tpu_custom_call.1} parent=31 // pred_fallthru
          _
      $region32: #{tpu_custom_call.1} parent=5 // pred_fallthru
        _
      %p571 = scmp.le.s32.totalorder 2, %s13
      // Predicated region
      $region41: #{tpu_custom_call.1} parent=5 // pred_check
        %p572 = pneg %p571
      $region42: #{tpu_custom_call.1} parent=5 // pred_check_branch
        %574 = sbr.rel (%p572) target = $region44
      $region43: #{tpu_custom_call.1} parent=5 // pred_region
        %s575 = ssub.s32 %s13, 2
        // Predicated region
        $region45: #{tpu_custom_call.1} parent=43 // pred_check
          %p576 = pneg %p110
        $region46: #{tpu_custom_call.1} parent=43 // pred_check_branch
          %578 = sbr.rel (%p576) target = $region48
        $region47: #{tpu_custom_call.1} parent=43 // pred_region
          %s579 = sand.u32 %s95, 1
          %s580 = scalar_lea.sflag [#allocation5], %s579
          %s581 = sand.u32 %s95, 1
          %s582 = smul.addr %s581, 64
          %s583 = scalar_lea.vmem [#allocation6], %s582
          %584 = dma.done %s580, 1024
        $region48: #{tpu_custom_call.1} parent=43 // pred_fallthru
          _
      $region44: #{tpu_custom_call.1} parent=5 // pred_fallthru
        _
    $region6: #{tpu_custom_call.1} parent=1 // loop_footer
      %s17 = sadd.s32 1, %s13
    $region7: #{tpu_custom_call.1} parent=1 // loop_footer_branch
      %12 = sbr.rel target = $region3
    $region8: #{tpu_custom_call.1} parent=1 // loop_exit
      _
    %585 = vsyncpa [#allocation4], 1
    %s586 = scalar_lea.sflag [#allocation4], 1
    %587 = vsyncpa %s586, 1
    %588 = vsyncpa [#allocation5], 1
    %s589 = scalar_lea.sflag [#allocation5], 1
    %590 = vsyncpa %s589, 1

</llo_original>
